<compile_context>
chip_gen: v7x
topology: tpu7x:2x2x1
jax: 0.10.0
libtpu: 0.0.40
codegen_flags: <defaults>
</compile_context>

<pallas_src>
import jax
import jax.numpy as jnp
from jax.experimental import pallas as pl
from jax.experimental.pallas import tpu as pltpu


def _height_profile_kernel(x_ref, w_row_ref, w_col_ref, hx_ref, hy_ref, acc_ref):
    """One (batch-chunk, H-tile) step of the crop + height-profile reduction.

    x_ref     : (TB, TH, W) input surface tile (native dtype; cast to f32 here)
    w_row_ref : (1, TH, 1)  f32, 1/Hc inside the row-crop window, 0 outside
    w_col_ref : (1, 1, W)   f32, 1/Wc inside the col-crop window, 0 outside
    hx_ref    : (TB, W)     f32 profile in x-direction (resident across H tiles)
    hy_ref    : (TB, TH)    f32 profile in y-direction (written per H tile)
    acc_ref   : (TB, W)     f32 VMEM accumulator for hx across H tiles
    """
    h = pl.program_id(1)
    last_h = pl.num_programs(1) - 1

    x = x_ref[...].astype(jnp.float32)        # cast per tile; stream native dtype
    w_row = w_row_ref[...]                    # (1, TH, 1)
    w_col = w_col_ref[...]                    # (1, 1, W)

    # Select-mask the cropped-out border so NaN/Inf there cannot leak
    # (0 * NaN would).  Mem-bound kernel: the extra selects hide under DMA.
    # TODO(synk): if the Mosaic dump shows vld/VPU as the saturating slot on
    # v7x, fuse these two traversals into one strip loop (one load, two FMAs).
    hy_ref[...] = jnp.sum(jnp.where(w_col > 0.0, x * w_col, 0.0), axis=2)
    hx_part = jnp.sum(jnp.where(w_row > 0.0, x * w_row, 0.0), axis=1)

    @pl.when(h == 0)
    def _():
        acc_ref[...] = jnp.zeros_like(acc_ref)

    acc_ref[...] += hx_part

    @pl.when(h == last_h)
    def _():
        hx_ref[...] = acc_ref[...]


def _vmem_budget():
    """Generation-aware VMEM budgeting (v5e/v6e: 128 MiB, v7x: 64 MiB per TC)."""
    try:
        cap = int(pltpu.get_tpu_info().vmem_capacity_bytes)
    except Exception:  # non-TPU backend / interpret fallback
        cap = 64 * 1024 * 1024
    vmem_limit = min((cap * 3) // 4, 96 * 1024 * 1024)       # ~48 MiB v7x, ~96 MiB v5e/v6e
    # One input block is double-buffered by BlockSpec (2x), plus outputs + acc.
    per_buffer = max(1 * 1024 * 1024, min(vmem_limit // 6, 16 * 1024 * 1024))
    return per_buffer, vmem_limit


def _choose_tiles(B, H, W, itemsize, per_buffer):
    """Pick (TB, TH): sublane-aligned batch chunk and lane-aligned H tile."""
    img_bytes = H * W * itemsize
    row_chunk_bytes = W * itemsize

    # --- batch tile: multiple of 8, or the full batch (output sublane rule) ---
    max_tb = max(1, per_buffer // img_bytes)
    if B <= 8:
        tb = B
    elif max_tb >= B:
        # Whole batch fits one block.  Still split into >=2 (ideally 4) even,
        # aligned chunks so the double-buffer pipeline has steps to overlap
        # and both v7x TensorCores get equal work.
        tb = B
        for chunks in (4, 2):
            if B % chunks == 0 and (B // chunks) % 8 == 0:
                tb = B // chunks
                break
    elif max_tb >= 8:
        tb = (max_tb // 8) * 8
    else:
        tb = 8  # image too large for 8 full images per block -> H-tile below

    # --- H tile: full H, or a multiple of 128 dividing H (output lane rule) ---
    if tb * img_bytes <= per_buffer:
        th = H
    else:
        th = None
        max_th = max(1, per_buffer // (tb * row_chunk_bytes))
        start = min(H // 128, max_th // 128) * 128
        for cand in range(start, 0, -128):
            if H % cand == 0:
                th = cand
                break
        if th is None:
            # TODO(synk): H has no small-enough multiple-of-128 divisor; fall
            # back to a full-H block (may exceed the per-buffer budget).
            th = H
    return tb, th


class BaseNetPallas:
    """JAX/Pallas counterpart of models.BaseNet."""

    def __init__(self, crop: int):
        self.crop = int(crop)

    def forward(self, x):
        # PyTorch BaseNet.forward is `pass` -> returns None.  Exact semantics kept.
        return None

    def __call__(self, x):
        return self.forward(x)

    def height_profiles(self, surface: jax.Array, *, per_buffer_budget_bytes=None):
        """Crop + height-profile reduction (the module's numerical hot path).

        surface: (B, H, W) float array in its *native* dtype (bf16 preferred
                 upstream: halves HBM traffic; cast to f32 happens per tile
                 inside the kernel).
        returns: (profile_x: (B, W-2*crop), profile_y: (B, H-2*crop)) in f32,
                 per-batch-element getHeightProfile(surface[..., c:-c, c:-c],
                 divide_by_mean=False).
        """
        crop = self.crop
        B, H, W = surface.shape
        Hc, Wc = H - 2 * crop, W - 2 * crop
        assert Hc > 0 and Wc > 0, "crop too large for surface"

        itemsize = jnp.dtype(surface.dtype).itemsize
        per_buffer, vmem_limit = _vmem_budget()
        if per_buffer_budget_bytes is not None:  # test hook for the H-tiled path
            per_buffer = int(per_buffer_budget_bytes)
        tb, th = _choose_tiles(B, H, W, itemsize, per_buffer)

        # Crop + 1/Hc (resp. 1/Wc) normalization folded into tiny resident
        # weight inputs; the reduction stays full-tile / vreg aligned.
        ridx = jnp.arange(H, dtype=jnp.int32)
        cidx = jnp.arange(W, dtype=jnp.int32)
        w_row = jnp.where((ridx >= crop) & (ridx < H - crop),
                          1.0 / float(Hc), 0.0).astype(jnp.float32).reshape(1, H, 1)
        w_col = jnp.where((cidx >= crop) & (cidx < W - crop),
                          1.0 / float(Wc), 0.0).astype(jnp.float32).reshape(1, 1, W)

        grid = (pl.cdiv(B, tb), H // th)
        # NOTE: when B % tb != 0 the last batch chunk reads OOB-padded rows;
        # their (garbage) results land only in output rows that Pallas clips.

        hx_full, hy_full = pl.pallas_call(
            _height_profile_kernel,
            out_shape=(
                jax.ShapeDtypeStruct((B, W), jnp.float32),
                jax.ShapeDtypeStruct((B, H), jnp.float32),
            ),
            grid_spec=pltpu.PrefetchScalarGridSpec(
                num_scalar_prefetch=0,
                grid=grid,
                in_specs=[
                    pl.BlockSpec((tb, th, W), lambda b, h: (b, h, 0)),
                    pl.BlockSpec((1, th, 1), lambda b, h: (0, h, 0)),
                    pl.BlockSpec((1, 1, W), lambda b, h: (0, 0, 0)),
                ],
                out_specs=(
                    pl.BlockSpec((tb, W), lambda b, h: (b, 0)),
                    pl.BlockSpec((tb, th), lambda b, h: (b, h)),
                ),
                scratch_shapes=[pltpu.VMEM((tb, W), jnp.float32)],
            ),
            compiler_params=pltpu.CompilerParams(
                dimension_semantics=("parallel", "arbitrary"),
                vmem_limit_bytes=vmem_limit,
            ),
        )(surface, w_row, w_col)

        # Output-axis crop is layout plumbing outside the kernel (the cropped
        # rows/cols were already excluded by the masked weights).
        profile_x = hx_full[:, crop:W - crop]   # (B, Wc)
        profile_y = hy_full[:, crop:H - crop]   # (B, Hc)
        return profile_x, profile_y


def _reference_profiles(surface_f32, crop):
    H, W = surface_f32.shape[1], surface_f32.shape[2]
    cropped = surface_f32[:, crop:H - crop, crop:W - crop]
    return jnp.mean(cropped, axis=1), jnp.mean(cropped, axis=2)


if __name__ == "__main__":
    key = jax.random.PRNGKey(0)
    net = BaseNetPallas(crop=2)

    # --- test 1: small f32 surface (module-scale shapes), single-step grid ---
    B, H, W = 2, 16, 16
    surface = jax.random.uniform(key, (B, H, W), dtype=jnp.float32)

    # forward() is a no-op, exactly like the PyTorch module.
    assert net.forward(surface) is None

    px, py = net.height_profiles(surface)
    jax.block_until_ready((px, py))
    rx, ry = _reference_profiles(surface, net.crop)
    assert px.shape == rx.shape and py.shape == ry.shape
    assert jnp.allclose(px, rx, atol=1e-5), "test1 profile_x mismatch"
    assert jnp.allclose(py, ry, atol=1e-5), "test1 profile_y mismatch"

    # --- test 2: bf16 input (native-dtype streaming), 2 batch chunks on the
    # "parallel" grid axis ---
    net8 = BaseNetPallas(crop=8)
    k2 = jax.random.PRNGKey(1)
    s2 = jax.random.uniform(k2, (16, 128, 256), dtype=jnp.float32).astype(jnp.bfloat16)
    px2, py2 = net8.height_profiles(s2)
    jax.block_until_ready((px2, py2))
    rx2, ry2 = _reference_profiles(s2.astype(jnp.float32), net8.crop)
    assert jnp.allclose(px2, rx2, atol=1e-3), "test2 profile_x mismatch"
    assert jnp.allclose(py2, ry2, atol=1e-3), "test2 profile_y mismatch"

    # --- test 3: force the H-tiled "arbitrary" reduction axis (accumulator +
    # pl.when init/writeback) via a small per-buffer budget ---
    net4 = BaseNetPallas(crop=4)
    k3 = jax.random.PRNGKey(2)
    s3 = jax.random.uniform(k3, (8, 256, 128), dtype=jnp.float32)
    px3, py3 = net4.height_profiles(s3, per_buffer_budget_bytes=512 * 1024)
    jax.block_until_ready((px3, py3))
    rx3, ry3 = _reference_profiles(s3, net4.crop)
    assert jnp.allclose(px3, rx3, atol=1e-4), "test3 profile_x mismatch"
    assert jnp.allclose(py3, ry3, atol=1e-4), "test3 profile_y mismatch"

    print("KERNEL_OK")
</pallas_src>

<mosaic_0001>
module attributes {stable_mosaic.version = 11 : i64} {
  func.func @_height_profile_kernel(%arg0: i32, %arg1: i32, %arg2: memref<2x16x16xf32, #tpu.memory_space<vmem>>, %arg3: memref<1x16x1xf32, #tpu.memory_space<vmem>>, %arg4: memref<1x1x16xf32, #tpu.memory_space<vmem>>, %arg5: memref<2x16xf32, #tpu.memory_space<vmem>>, %arg6: memref<2x16xf32, #tpu.memory_space<vmem>>, %arg7: memref<2x16xf32, #tpu.memory_space<vmem>>) attributes {dimension_semantics = [#tpu.dimension_semantics<parallel>, #tpu.dimension_semantics<arbitrary>], iteration_bounds = array<i64: 1, 1>, scalar_prefetch = 0 : i64, scratch_operands = 1 : i64, tpu.core_type = #tpu.core_type<tc>, window_params = [{transform_indices = @transform_0, window_bounds = array<i64: 2, 16, 16>}, {transform_indices = @transform_1, window_bounds = array<i64: 1, 16, 1>}, {pipeline_mode = #tpu.pipeline_mode<synchronous>, transform_indices = @transform_2, window_bounds = array<i64: 1, 1, 16>}, {transform_indices = @transform_3, window_bounds = array<i64: 2, 16>}, {transform_indices = @transform_4, window_bounds = array<i64: 2, 16>}]} {
    %c0 = arith.constant 0 : index
    %c0_0 = arith.constant 0 : index
    %c0_1 = arith.constant 0 : index
    %0 = vector.load %arg2[%c0, %c0_0, %c0_1] : memref<2x16x16xf32, #tpu.memory_space<vmem>>, vector<2x16x16xf32>
    %c0_2 = arith.constant 0 : index
    %c0_3 = arith.constant 0 : index
    %c0_4 = arith.constant 0 : index
    %1 = vector.load %arg3[%c0_2, %c0_3, %c0_4] : memref<1x16x1xf32, #tpu.memory_space<vmem>>, vector<1x16x1xf32>
    %c0_5 = arith.constant 0 : index
    %c0_6 = arith.constant 0 : index
    %c0_7 = arith.constant 0 : index
    %2 = vector.load %arg4[%c0_5, %c0_6, %c0_7] : memref<1x1x16xf32, #tpu.memory_space<vmem>>, vector<1x1x16xf32>
    %cst = arith.constant 0.000000e+00 : f32
    %3 = vector.broadcast %cst : f32 to vector<1x1x16xf32>
    %4 = arith.cmpf ogt, %2, %3 : vector<1x1x16xf32>
    %5 = vector.broadcast %2 : vector<1x1x16xf32> to vector<2x16x16xf32>
    %6 = arith.mulf %0, %5 : vector<2x16x16xf32>
    %cst_8 = arith.constant 0.000000e+00 : f32
    %7 = vector.shape_cast %4 : vector<1x1x16xi1> to vector<1x1x16xi1>
    %8 = vector.broadcast %7 : vector<1x1x16xi1> to vector<2x16x16xi1>
    %9 = vector.broadcast %cst_8 : f32 to vector<2x16x16xf32>
    %10 = arith.select %8, %6, %9 : vector<2x16x16xi1>, vector<2x16x16xf32>
    %cst_9 = arith.constant dense<0.000000e+00> : vector<2x16xf32>
    %11 = vector.multi_reduction <add>, %10, %cst_9 [2] : vector<2x16x16xf32> to vector<2x16xf32>
    %c0_10 = arith.constant 0 : index
    %c0_11 = arith.constant 0 : index
    %12 = vector.load %arg6[%c0_10, %c0_11] : memref<2x16xf32, #tpu.memory_space<vmem>>, vector<2x16xf32>
    tpu.vector_store %arg6[%c0_10, %c0_11], %11 {strides = array<i32>} : memref<2x16xf32, #tpu.memory_space<vmem>>, vector<2x16xf32>,
    %cst_12 = arith.constant 0.000000e+00 : f32
    %13 = vector.broadcast %cst_12 : f32 to vector<1x16x1xf32>
    %14 = arith.cmpf ogt, %1, %13 : vector<1x16x1xf32>
    %15 = vector.broadcast %1 : vector<1x16x1xf32> to vector<2x16x16xf32>
    %16 = arith.mulf %0, %15 : vector<2x16x16xf32>
    %cst_13 = arith.constant 0.000000e+00 : f32
    %17 = vector.shape_cast %14 : vector<1x16x1xi1> to vector<1x16x1xi1>
    %18 = vector.broadcast %17 : vector<1x16x1xi1> to vector<2x16x16xi1>
    %19 = vector.broadcast %cst_13 : f32 to vector<2x16x16xf32>
    %20 = arith.select %18, %16, %19 : vector<2x16x16xi1>, vector<2x16x16xf32>
    %cst_14 = arith.constant dense<0.000000e+00> : vector<2x16xf32>
    %21 = vector.multi_reduction <add>, %20, %cst_14 [1] : vector<2x16x16xf32> to vector<2x16xf32>
    %c0_i32 = arith.constant 0 : i32
    %22 = arith.cmpi eq, %arg1, %c0_i32 : i32
    %23 = arith.extui %22 : i1 to i32
    %c0_i32_15 = arith.constant 0 : i32
    %24 = arith.cmpi ne, %23, %c0_i32_15 : i32
    scf.if %24 {
      %cst_22 = arith.constant 0.000000e+00 : f32
      %31 = vector.broadcast %cst_22 : f32 to vector<2x16xf32>
      %c0_23 = arith.constant 0 : index
      %c0_24 = arith.constant 0 : index
      %32 = vector.load %arg7[%c0_23, %c0_24] : memref<2x16xf32, #tpu.memory_space<vmem>>, vector<2x16xf32>
      tpu.vector_store %arg7[%c0_23, %c0_24], %31 {strides = array<i32>} : memref<2x16xf32, #tpu.memory_space<vmem>>, vector<2x16xf32>,
    } else {
    }
    %c0_16 = arith.constant 0 : index
    %c0_17 = arith.constant 0 : index
    %25 = vector.load %arg7[%c0_16, %c0_17] : memref<2x16xf32, #tpu.memory_space<vmem>>, vector<2x16xf32>
    %26 = arith.addf %25, %21 : vector<2x16xf32>
    %c0_18 = arith.constant 0 : index
    %c0_19 = arith.constant 0 : index
    %27 = vector.load %arg7[%c0_18, %c0_19] : memref<2x16xf32, #tpu.memory_space<vmem>>, vector<2x16xf32>
    tpu.vector_store %arg7[%c0_18, %c0_19], %26 {strides = array<i32>} : memref<2x16xf32, #tpu.memory_space<vmem>>, vector<2x16xf32>,
    %c0_i32_20 = arith.constant 0 : i32
    %28 = arith.cmpi eq, %arg1, %c0_i32_20 : i32
    %29 = arith.extui %28 : i1 to i32
    %c0_i32_21 = arith.constant 0 : i32
    %30 = arith.cmpi ne, %29, %c0_i32_21 : i32
    scf.if %30 {
      %c0_22 = arith.constant 0 : index
      %c0_23 = arith.constant 0 : index
      %31 = vector.load %arg7[%c0_22, %c0_23] : memref<2x16xf32, #tpu.memory_space<vmem>>, vector<2x16xf32>
      %c0_24 = arith.constant 0 : index
      %c0_25 = arith.constant 0 : index
      %32 = vector.load %arg5[%c0_24, %c0_25] : memref<2x16xf32, #tpu.memory_space<vmem>>, vector<2x16xf32>
      tpu.vector_store %arg5[%c0_24, %c0_25], %31 {strides = array<i32>} : memref<2x16xf32, #tpu.memory_space<vmem>>, vector<2x16xf32>,
    } else {
    }
    return
  }
  func.func @transform_0(%arg0: i32, %arg1: i32) -> (i32, i32, i32) {
    %c0_i32 = arith.constant 0 : i32
    %c0_i32_0 = arith.constant 0 : i32
    return %arg0, %arg1, %c0_i32 : i32, i32, i32
  }
  func.func @transform_1(%arg0: i32, %arg1: i32) -> (i32, i32, i32) {
    %c0_i32 = arith.constant 0 : i32
    %c0_i32_0 = arith.constant 0 : i32
    %c0_i32_1 = arith.constant 0 : i32
    return %c0_i32, %arg1, %c0_i32_0 : i32, i32, i32
  }
  func.func @transform_2(%arg0: i32, %arg1: i32) -> (i32, i32, i32) {
    %c0_i32 = arith.constant 0 : i32
    %c0_i32_0 = arith.constant 0 : i32
    %c0_i32_1 = arith.constant 0 : i32
    %c0_i32_2 = arith.constant 0 : i32
    return %c0_i32, %c0_i32_0, %c0_i32_1 : i32, i32, i32
  }
  func.func @transform_3(%arg0: i32, %arg1: i32) -> (i32, i32) {
    %c0_i32 = arith.constant 0 : i32
    %c0_i32_0 = arith.constant 0 : i32
    return %arg0, %c0_i32 : i32, i32
  }
  func.func @transform_4(%arg0: i32, %arg1: i32) -> (i32, i32) {
    %c0_i32 = arith.constant 0 : i32
    return %arg0, %arg1 : i32, i32
  }
}

</mosaic_0001>

<llo_original>
// kernel: tpu_custom_call.1
$region0: #{tpu_custom_call.1}
  #allocation0 [shape = 'u32[]', space=smem, size = 0x4, offset = 0x4, fixed_abs, tag = 'smem constant byte address 0x4 - core index']
  #allocation1 [shape = 'u32[144,128]{1,0:T(1,128)}', space=vmem, size = 0x12000, scoped, tag = 'internal scratch']
  #allocation2 [shape = 'f32[2,16]{1,0:T(2,128)}', space=vmem, size = 0x400, scoped, tag = 'scratch operand']
  %s0 = inlined_call_operand.hbm [shape: f32[2,16,16], index: 0, kind: input, shape index: {}]
  %s1 = inlined_call_operand.vmem [shape: f32[1,16,1], index: 1, kind: input, shape index: {}]
  %s2 = inlined_call_operand.vmem [shape: f32[1,1,16], index: 2, kind: input, shape index: {}]
  %s3 = inlined_call_operand.hbm [shape: f32[2,16], index: 3, kind: output, shape index: {0}]
  %s4 = inlined_call_operand.hbm [shape: f32[2,16], index: 4, kind: output, shape index: {1}]
  %5 = xla_tuple %s3, %s4
  %s6 = sld [smem:[#allocation0]]
  $region42: #{tpu_custom_call.1} parent=0
    _
  %s8 = ssub.s32 1, %s6
  %s9 = scalar_select 0, %s8, %s6
  $region1: #{tpu_custom_call.1} parent=0
    #allocation3 [shape = 'u8[16384]{0}', space=vmem, size = 0x4000, scoped, tag = 'input window, operand 0, single buffered']
    #allocation4 [shape = 's32[1]{0}', space=sflag, size = 0x4, scoped, tag = 'scoped memory for tpu_custom_call.1']
    #allocation5 [shape = 's32[1]{0}', space=sflag, size = 0x4, scoped, tag = 'scoped memory for tpu_custom_call.1']
    #allocation6 [shape = 'u8[1024]{0}', space=vmem, size = 0x400, scoped, tag = 'output window, operand 0, single buffered']
    #allocation7 [shape = 'u8[1024]{0}', space=vmem, size = 0x400, scoped, tag = 'output window, operand 1, single buffered']
    #allocation8 [shape = 's32[1]{0}', space=sflag, size = 0x4, scoped, tag = 'scoped memory for tpu_custom_call.1']
    %10 = vsyncpa [#allocation4], 0
    %11 = vsyncpa [#allocation5], 0
    %12 = vsyncpa [#allocation8], 0
    // Predicated region
    $region2: #{tpu_custom_call.1} parent=1 // pred_check
      _
    $region3: #{tpu_custom_call.1} parent=1 // pred_check_branch
      %14 = sbr.rel (0) target = $region5
    $region4: #{tpu_custom_call.1} parent=1 // pred_region
      %s16 = ssub.s32 512, 512
      %17 = vsyncadd [#allocation4], %s16
      %s18 = sshll.u32 [#allocation3], 4
      %s19 = int_to_ptr.vmem [resolvable:$true] %s18
      %24 = dma.hbm_to_vmem [thread:$0]  %s0, 512, %s19, [#allocation4], 128, 128, 8
    $region5: #{tpu_custom_call.1} parent=1 // pred_fallthru
      _
    // Predicated region
    $region6: #{tpu_custom_call.1} parent=1 // pred_check
      _
    $region7: #{tpu_custom_call.1} parent=1 // pred_check_branch
      %26 = sbr.rel (0) target = $region9
    $region8: #{tpu_custom_call.1} parent=1 // pred_region
      _
    $region9: #{tpu_custom_call.1} parent=1 // pred_fallthru
      _
    // Predicated region
    $region10: #{tpu_custom_call.1} parent=1 // pred_check
      _
    $region11: #{tpu_custom_call.1} parent=1 // pred_check_branch
      %28 = sbr.rel (0) target = $region13
    $region12: #{tpu_custom_call.1} parent=1 // pred_region
      _
    $region13: #{tpu_custom_call.1} parent=1 // pred_fallthru
      _
    // Predicated region
    $region14: #{tpu_custom_call.1} parent=1 // pred_check
      _
    $region15: #{tpu_custom_call.1} parent=1 // pred_check_branch
      %30 = sbr.rel (0) target = $region17
    $region16: #{tpu_custom_call.1} parent=1 // pred_region
      %31 = dma.done [#allocation4], 512
    $region17: #{tpu_custom_call.1} parent=1 // pred_fallthru
      _
    %v32 = vld [vmem:[#allocation3] sm:$0xff]
    %v33 = vld [vmem:[#allocation3 + $0x8] sm:$0xff]
    %v34 = vld [vmem:[#allocation3 + $0x10] sm:$0xff]
    %v35 = vld [vmem:[#allocation3 + $0x18] sm:$0xff]
    %v36 = vld [vmem:[%s1] sm:$0xff]
    %v37 = vld [vmem:[%s1 + $0x8] sm:$0xff]
    %v38 = vld [vmem:[%s2] sm:$0x1]
    %vm39 = vcmp.gt.f32.partialorder %v38, 0.0
    %v41 = vlaneseq
    %v42 = vshrl.u32 %v41, 7
    %v43 = vsub.s32 0, %v42
    %v44 = vrot.slane %v38, %v43
    %v46 = vmul.f32 %v32, %v44
    %v47 = vmul.f32 %v33, %v44
    %v48 = vmul.f32 %v34, %v44
    %v49 = vmul.f32 %v35, %v44
    %v50 = vsel %vm39, 1, 0
    %v51 = vlaneseq
    %v52 = vshrl.u32 %v51, 7
    %v53 = vsub.s32 0, %v52
    %v54 = vrot.slane %v50, %v53
    %vm55 = vcmp.eq.s32.totalorder %v54, 1
    %v56 = vsel %vm55, %v46, 0.0
    %v57 = vsel %vm55, %v47, 0.0
    %v58 = vsel %vm55, %v48, 0.0
    %v59 = vsel %vm55, %v49, 0.0
    %vm60 = vcmask 130048
    %v61 = vsel %vm60, %v56, 0.0
    %62 = vadd.xlane.f32.xlu0 %v61
    %v63 = vpop.xlane.xlu0 %62
    %v64 = vsel %vm60, %v57, 0.0
    %65 = vadd.xlane.f32.xlu0 %v64
    %v66 = vpop.xlane.xlu0 %65
    %v67 = vsel %vm60, %v58, 0.0
    %68 = vadd.xlane.f32.xlu0 %v67
    %v69 = vpop.xlane.xlu0 %68
    %v70 = vsel %vm60, %v59, 0.0
    %71 = vadd.xlane.f32.xlu0 %v70
    %v72 = vpop.xlane.xlu0 %71
    %v77 = vlaneseq
    %v78 = vand.u32 %v77, 127
    %v79 = vlaneseq
    %v80 = vshrl.u32 %v79, 7
    %v81 = vsub.s32 %v78, %v80
    %v82 = vrot.slane %v63, %v81
    %v83 = vadd.s32 %v78, 4294967288
    %v84 = vlaneseq
    %v85 = vshrl.u32 %v84, 7
    %v86 = vsub.s32 %v83, %v85
    %v87 = vrot.slane %v66, %v86
    %vm88 = vcmask 130112
    %v89 = vsel %vm88, %v87, %v82
    %v90 = vlaneseq
    %v91 = vshrl.u32 %v90, 7
    %v92 = vsub.s32 %v78, %v91
    %v93 = vrot.slane %v69, %v92
    %v94 = vlaneseq
    %v95 = vshrl.u32 %v94, 7
    %v96 = vsub.s32 %v83, %v95
    %v97 = vrot.slane %v72, %v96
    %v98 = vsel %vm88, %v97, %v93
    %vm99 = vcmask 1041409
    %v100 = vsel %vm99, %v98, %v89
    %vm102 = vcmask 123904
    %103 = vst.msk [vmem:[#allocation7] sm:$0x3] %vm102, %v100
    %vm104 = vcmp.gt.f32.partialorder %v36, 0.0
    %vm105 = vcmp.gt.f32.partialorder %v37, 0.0
    %107 = vset.pattern.permute.xlu0 0
    %108 = vperm.xlu0 %107, %v36
    %v109 = vpop.permute.xlu0 %108
    %112 = vset.pattern.permute.xlu0 0
    %113 = vperm.xlu0 %112, %v37
    %v114 = vpop.permute.xlu0 %113
    %v116 = vmul.f32 %v32, %v109
    %v117 = vmul.f32 %v33, %v114
    %v118 = vmul.f32 %v34, %v109
    %v119 = vmul.f32 %v35, %v114
    %v120 = vsel %vm104, 1, 0
    %v121 = vsel %vm105, 1, 0
    %122 = vset.pattern.permute.xlu0 0
    %123 = vperm.xlu0 %122, %v120
    %v124 = vpop.permute.xlu0 %123
    %125 = vset.pattern.permute.xlu0 0
    %126 = vperm.xlu0 %125, %v121
    %v127 = vpop.permute.xlu0 %126
    %vm128 = vcmp.eq.s32.totalorder %v124, 1
    %vm129 = vcmp.eq.s32.totalorder %v127, 1
    %v130 = vsel %vm128, %v116, 0.0
    %v131 = vsel %vm129, %v117, 0.0
    %v132 = vsel %vm128, %v118, 0.0
    %v133 = vsel %vm129, %v119, 0.0
    %v134 = vsel %vm60, %v130, 0.0
    %v135 = vsel %vm60, %v131, 0.0
    %v136 = vadd.f32 %v134, %v135
    %v137 = vrot.slane %v136, 4
    %v138 = vadd.f32 %v136, %v137
    %v139 = vrot.slane %v138, 2
    %v140 = vadd.f32 %v138, %v139
    %v141 = vrot.slane %v140, 1
    %v142 = vadd.f32 %v140, %v141
    %v143 = vsel %vm60, %v132, 0.0
    %v144 = vsel %vm60, %v133, 0.0
    %v145 = vadd.f32 %v143, %v144
    %v146 = vrot.slane %v145, 4
    %v147 = vadd.f32 %v145, %v146
    %v148 = vrot.slane %v147, 2
    %v149 = vadd.f32 %v147, %v148
    %v150 = vrot.slane %v149, 1
    %v151 = vadd.f32 %v149, %v150
    %p152 = scmp.eq.s32.totalorder 0, 0
    // Predicated region
    $region18: #{tpu_custom_call.1} parent=1 // pred_check
      %p153 = pneg %p152
    $region19: #{tpu_custom_call.1} parent=1 // pred_check_branch
      %155 = sbr.rel (%p153) target = $region21
    $region20: #{tpu_custom_call.1} parent=1 // pred_region
      %156 = vst.msk [vmem:[#allocation2] sm:$0x3] %vm102, 0.0
    $region21: #{tpu_custom_call.1} parent=1 // pred_fallthru
      _
    %v157 = vld [vmem:[#allocation2] sm:$0x3]
    %v160 = vsel %vm99, %v151, %v142
    %v162 = vadd.f32 %v157, %v160
    %163 = vst.msk [vmem:[#allocation2] sm:$0x3] %vm102, %v162
    // Predicated region
    $region22: #{tpu_custom_call.1} parent=1 // pred_check
      %p164 = pneg %p152
    $region23: #{tpu_custom_call.1} parent=1 // pred_check_branch
      %166 = sbr.rel (%p164) target = $region25
    $region24: #{tpu_custom_call.1} parent=1 // pred_region
      %v167 = vld [vmem:[#allocation2] sm:$0x3]
      %168 = vst.msk [vmem:[#allocation6] sm:$0x3] %vm102, %v167
    $region25: #{tpu_custom_call.1} parent=1 // pred_fallthru
      _
    // Predicated region
    $region26: #{tpu_custom_call.1} parent=1 // pred_check
      _
    $region27: #{tpu_custom_call.1} parent=1 // pred_check_branch
      %170 = sbr.rel (0) target = $region29
    $region28: #{tpu_custom_call.1} parent=1 // pred_region
      %s172 = ssub.s32 32, 32
      %173 = vsyncadd [#allocation5], %s172
      %s175 = sshll.u32 [#allocation6], 4
      %s176 = int_to_ptr.vmem [resolvable:$true] %s175
      %178 = dma.vmem_to_hbm [thread:$0]  %s176, 32, %s3, [#allocation5]
    $region29: #{tpu_custom_call.1} parent=1 // pred_fallthru
      _
    // Predicated region
    $region30: #{tpu_custom_call.1} parent=1 // pred_check
      _
    $region31: #{tpu_custom_call.1} parent=1 // pred_check_branch
      %180 = sbr.rel (0) target = $region33
    $region32: #{tpu_custom_call.1} parent=1 // pred_region
      %s182 = ssub.s32 32, 32
      %183 = vsyncadd [#allocation8], %s182
      %s185 = sshll.u32 [#allocation7], 4
      %s186 = int_to_ptr.vmem [resolvable:$true] %s185
      %188 = dma.vmem_to_hbm [thread:$0]  %s186, 32, %s4, [#allocation8]
    $region33: #{tpu_custom_call.1} parent=1 // pred_fallthru
      _
    // Predicated region
    $region34: #{tpu_custom_call.1} parent=1 // pred_check
      _
    $region35: #{tpu_custom_call.1} parent=1 // pred_check_branch
      %190 = sbr.rel (0) target = $region37
    $region36: #{tpu_custom_call.1} parent=1 // pred_region
      %191 = dma.done [#allocation5], 32
    $region37: #{tpu_custom_call.1} parent=1 // pred_fallthru
      _
    // Predicated region
    $region38: #{tpu_custom_call.1} parent=1 // pred_check
      _
    $region39: #{tpu_custom_call.1} parent=1 // pred_check_branch
      %193 = sbr.rel (0) target = $region41
    $region40: #{tpu_custom_call.1} parent=1 // pred_region
      %194 = dma.done [#allocation8], 32
    $region41: #{tpu_custom_call.1} parent=1 // pred_fallthru
      _
    %195 = vsyncpa [#allocation4], 1
    %196 = vsyncpa [#allocation5], 1
    %197 = vsyncpa [#allocation8], 1

</llo_original>
